<compile_context>
chip_gen: v7x
topology: tpu7x:2x2x1
jax: 0.10.0
libtpu: 0.0.40
codegen_flags: <defaults>
</compile_context>

<pallas_src>
import math
import functools

import jax
import jax.numpy as jnp
from jax.experimental import pallas as pl
from jax.experimental.pallas import tpu as pltpu


def _round_up(x, m):
    return ((x + m - 1) // m) * m


def _dt1_head_kernel(x_ref, w_ref, b_ref, lab_ref, prob_ref, loss_ref):
    # x_ref:   (tm, H)  CLS-token rows (compute dtype, e.g. bf16)
    # w_ref:   (H, T)   resident classifier weight (transposed), one DMA total
    # b_ref:   (1, T)   resident classifier bias, one DMA total
    # lab_ref: (tm, T)  labels in {-1, +1}
    # prob_ref/loss_ref: (tm, T) float32
    logits = jnp.dot(x_ref[...], w_ref[...], preferred_element_type=jnp.float32)
    logits = logits + b_ref[...].astype(jnp.float32)

    # Sigmoid (exp goes to the EUP slot; the divide is cheap VPU work at T lanes).
    p = 1.0 / (1.0 + jnp.exp(-logits))
    prob_ref[...] = p.astype(prob_ref.dtype)

    # BCELoss(reduction='none') on targets (labels + 1) / 2, with PyTorch's -100 log clamp.
    t = (lab_ref[...].astype(jnp.float32) + 1.0) * 0.5
    log_p = jnp.maximum(jnp.log(p), -100.0)
    log_1mp = jnp.maximum(jnp.log(1.0 - p), -100.0)
    loss_ref[...] = (-(t * log_p + (1.0 - t) * log_1mp)).astype(loss_ref.dtype)


def prepare_classifier_params(cls_weight, cls_bias, compute_dtype=jnp.bfloat16):
    """One-time parameter prep (hoisted out of the per-forward path).

    cls_weight: [T, H] (PyTorch nn.Linear layout) -> returned as [H, T] in the
    matmul compute dtype so H sits on the contraction axis.  cls_bias: [T].
    """
    w_t = jnp.asarray(cls_weight).T
    if compute_dtype is not None:
        w_t = w_t.astype(compute_dtype)
    return w_t, jnp.asarray(cls_bias)


@functools.partial(jax.jit, static_argnames=("tm", "compute_dtype"))
def dt1_forward(last_hidden_state, w_t, cls_bias, labels, *, tm=1024,
                compute_dtype=jnp.bfloat16):
    """DT1Model (train mode) head.

    last_hidden_state: [B, S, H]  (BERT encoder output)
    w_t:               [H, T]     (pre-transposed classifier weight, see
                                   prepare_classifier_params)
    cls_bias:          [T]
    labels:            [B, T] (or [B, 1, T]) with values in {-1, +1}
    Returns (probs [B, T] f32, loss [B, T] f32).
    """
    B, S, H = last_hidden_state.shape
    Hw, T = w_t.shape
    assert Hw == H, "weight / hidden-size mismatch"

    if labels.ndim == 3:  # mirrors `labels = labels.squeeze(1)` in the torch forward
        labels = labels[:, 0, :]

    # CLS token extraction: out.last_hidden_state[:, 0, :].  This is a tiny fused
    # slice(+convert) over B*H elements — no padded materialization.
    cls = last_hidden_state[:, 0, :]
    if compute_dtype is not None and cls.dtype != compute_dtype:
        cls = cls.astype(compute_dtype)
    w = w_t
    if compute_dtype is not None and w.dtype != compute_dtype:
        w = w.astype(compute_dtype)
    b2 = cls_bias.reshape(1, T).astype(jnp.float32)

    # Row tile: multiple of 8 sublanes; never pad the batch up to a multiple of
    # the tile (partial tail block is masked by Pallas); cap the tile so the 1-D
    # "parallel" grid has >= 2 steps whenever B allows it (v7x megacore).
    B8 = _round_up(B, 8)
    tm_eff = min(_round_up(max(int(tm), 8), 8), B8)
    if B8 >= 16:
        tm_eff = min(tm_eff, _round_up(pl.cdiv(B8, 2), 8))
    grid = (pl.cdiv(B, tm_eff),)

    probs, loss = pl.pallas_call(
        _dt1_head_kernel,
        out_shape=(
            jax.ShapeDtypeStruct((B, T), jnp.float32),
            jax.ShapeDtypeStruct((B, T), jnp.float32),
        ),
        grid_spec=pltpu.PrefetchScalarGridSpec(
            num_scalar_prefetch=0,
            grid=grid,
            in_specs=[
                pl.BlockSpec((tm_eff, H), lambda i: (i, 0)),  # CLS rows (tiled over batch)
                pl.BlockSpec((H, T), lambda i: (0, 0)),       # resident weight: one DMA total
                pl.BlockSpec((1, T), lambda i: (0, 0)),       # resident bias: one DMA total
                pl.BlockSpec((tm_eff, T), lambda i: (i, 0)),  # labels (tiled over batch, unpadded)
            ],
            out_specs=[
                pl.BlockSpec((tm_eff, T), lambda i: (i, 0)),
                pl.BlockSpec((tm_eff, T), lambda i: (i, 0)),
            ],
        ),
        compiler_params=pltpu.CompilerParams(
            dimension_semantics=("parallel",),   # shard row tiles across v7x's 2 TCs
            vmem_limit_bytes=48 << 20,           # headroom for big tm/H, under v7x's 64 MiB
        ),
    )(cls, w, b2, labels)

    return probs, loss


def _reference(last_hidden_state, cls_weight, cls_bias, labels, compute_dtype=None):
    cls = last_hidden_state[:, 0, :]
    w = cls_weight
    if compute_dtype is not None:
        cls = cls.astype(compute_dtype)
        w = w.astype(compute_dtype)
    logits = jnp.dot(cls, w.T, preferred_element_type=jnp.float32)
    logits = logits + cls_bias.astype(jnp.float32)
    p = 1.0 / (1.0 + jnp.exp(-logits))
    t = (labels.astype(jnp.float32) + 1.0) * 0.5
    loss = -(
        t * jnp.maximum(jnp.log(p), -100.0)
        + (1.0 - t) * jnp.maximum(jnp.log(1.0 - p), -100.0)
    )
    return p, loss


if __name__ == "__main__":
    # Small shapes consistent with the module: batch=2, seq=8, hidden=32, task_num=4.
    B, S, H, T = 2, 8, 32, 4

    key = jax.random.PRNGKey(0)
    kx, kw, kl = jax.random.split(key, 3)

    last_hidden_state = jax.random.normal(kx, (B, S, H), dtype=jnp.float32)
    bound = 1.0 / math.sqrt(H)
    cls_weight = jax.random.uniform(kw, (T, H), minval=-bound, maxval=bound,
                                    dtype=jnp.float32)
    cls_bias = jnp.zeros((T,), jnp.float32)  # DT1Model._init_weights zeroes the classifier bias
    labels = jax.random.bernoulli(kl, 0.5, (B, T)).astype(jnp.float32) * 2.0 - 1.0

    # One-time param prep (transpose + bf16 cast), hoisted out of the forward path.
    w_t, b = prepare_classifier_params(cls_weight, cls_bias, compute_dtype=jnp.bfloat16)

    probs, loss = dt1_forward(last_hidden_state, w_t, b, labels)
    probs, loss = jax.block_until_ready((probs, loss))

    # Reference uses the same bf16 compute path so the comparison is apples-to-apples.
    ref_p, ref_l = _reference(last_hidden_state, cls_weight, cls_bias, labels,
                              compute_dtype=jnp.bfloat16)
    assert probs.shape == (B, T) and loss.shape == (B, T)
    assert probs.dtype == jnp.float32 and loss.dtype == jnp.float32
    assert jnp.allclose(probs, ref_p, atol=1e-4, rtol=1e-4), "probs mismatch vs reference"
    assert jnp.allclose(loss, ref_l, atol=1e-4, rtol=1e-4), "loss mismatch vs reference"

    print("KERNEL_OK")
</pallas_src>

<mosaic_0001>
module attributes {stable_mosaic.version = 11 : i64} {
  func.func @_dt1_head_kernel(%arg0: i32, %arg1: memref<8x32xbf16, #tpu.memory_space<vmem>>, %arg2: memref<32x4xbf16, #tpu.memory_space<vmem>>, %arg3: memref<1x4xf32, #tpu.memory_space<vmem>>, %arg4: memref<8x4xf32, #tpu.memory_space<vmem>>, %arg5: memref<8x4xf32, #tpu.memory_space<vmem>>, %arg6: memref<8x4xf32, #tpu.memory_space<vmem>>) attributes {dimension_semantics = [#tpu.dimension_semantics<parallel>], iteration_bounds = array<i64: 1>, scalar_prefetch = 0 : i64, scratch_operands = 0 : i64, tpu.core_type = #tpu.core_type<tc>, window_params = [{transform_indices = @transform_0, window_bounds = array<i64: 8, 32>}, {pipeline_mode = #tpu.pipeline_mode<synchronous>, transform_indices = @transform_1, window_bounds = array<i64: 32, 4>}, {pipeline_mode = #tpu.pipeline_mode<synchronous>, transform_indices = @transform_2, window_bounds = array<i64: 1, 4>}, {transform_indices = @transform_3, window_bounds = array<i64: 8, 4>}, {transform_indices = @transform_4, window_bounds = array<i64: 8, 4>}, {transform_indices = @transform_5, window_bounds = array<i64: 8, 4>}]} {
    %c0 = arith.constant 0 : index
    %c0_0 = arith.constant 0 : index
    %0 = vector.load %arg1[%c0, %c0_0] : memref<8x32xbf16, #tpu.memory_space<vmem>>, vector<8x32xbf16>
    %c0_1 = arith.constant 0 : index
    %c0_2 = arith.constant 0 : index
    %1 = vector.load %arg2[%c0_1, %c0_2] : memref<32x4xbf16, #tpu.memory_space<vmem>>, vector<32x4xbf16>
    %cst = arith.constant dense<0.000000e+00> : vector<8x4xf32>
    %2 = tpu.matmul %0, %1, %cst {dimension_numbers = #tpu.dot_dimension_numbers<[1], [0], [0], [1], [0, 0, 1, 1], [], []>} : vector<8x32xbf16>, vector<32x4xbf16>, vector<8x4xf32> -> vector<8x4xf32>
    %c0_3 = arith.constant 0 : index
    %c0_4 = arith.constant 0 : index
    %3 = vector.load %arg3[%c0_3, %c0_4] : memref<1x4xf32, #tpu.memory_space<vmem>>, vector<1x4xf32>
    %4 = vector.broadcast %3 : vector<1x4xf32> to vector<8x4xf32>
    %5 = arith.addf %2, %4 : vector<8x4xf32>
    %cst_5 = arith.constant 0.000000e+00 : f32
    %6 = vector.broadcast %cst_5 : f32 to vector<8x4xf32>
    %7 = arith.subf %6, %5 : vector<8x4xf32>
    %8 = math.exp %7 : vector<8x4xf32>
    %cst_6 = arith.constant 1.000000e+00 : f32
    %9 = vector.broadcast %cst_6 : f32 to vector<8x4xf32>
    %10 = arith.addf %9, %8 : vector<8x4xf32>
    %cst_7 = arith.constant 1.000000e+00 : f32
    %11 = vector.broadcast %cst_7 : f32 to vector<8x4xf32>
    %12 = arith.divf %11, %10 : vector<8x4xf32>
    %c0_8 = arith.constant 0 : index
    %c0_9 = arith.constant 0 : index
    %13 = vector.load %arg5[%c0_8, %c0_9] : memref<8x4xf32, #tpu.memory_space<vmem>>, vector<8x4xf32>
    tpu.vector_store %arg5[%c0_8, %c0_9], %12 {strides = array<i32>} : memref<8x4xf32, #tpu.memory_space<vmem>>, vector<8x4xf32>,
    %c0_10 = arith.constant 0 : index
    %c0_11 = arith.constant 0 : index
    %14 = vector.load %arg4[%c0_10, %c0_11] : memref<8x4xf32, #tpu.memory_space<vmem>>, vector<8x4xf32>
    %cst_12 = arith.constant 1.000000e+00 : f32
    %15 = vector.broadcast %cst_12 : f32 to vector<8x4xf32>
    %16 = arith.addf %14, %15 : vector<8x4xf32>
    %cst_13 = arith.constant 5.000000e-01 : f32
    %17 = vector.broadcast %cst_13 : f32 to vector<8x4xf32>
    %18 = arith.mulf %16, %17 : vector<8x4xf32>
    %19 = math.log %12 : vector<8x4xf32>
    %cst_14 = arith.constant -1.000000e+02 : f32
    %20 = vector.broadcast %cst_14 : f32 to vector<8x4xf32>
    %21 = arith.maximumf %19, %20 : vector<8x4xf32>
    %cst_15 = arith.constant 1.000000e+00 : f32
    %22 = vector.broadcast %cst_15 : f32 to vector<8x4xf32>
    %23 = arith.subf %22, %12 : vector<8x4xf32>
    %24 = math.log %23 : vector<8x4xf32>
    %cst_16 = arith.constant -1.000000e+02 : f32
    %25 = vector.broadcast %cst_16 : f32 to vector<8x4xf32>
    %26 = arith.maximumf %24, %25 : vector<8x4xf32>
    %27 = arith.mulf %18, %21 : vector<8x4xf32>
    %cst_17 = arith.constant 1.000000e+00 : f32
    %28 = vector.broadcast %cst_17 : f32 to vector<8x4xf32>
    %29 = arith.subf %28, %18 : vector<8x4xf32>
    %30 = arith.mulf %29, %26 : vector<8x4xf32>
    %31 = arith.addf %27, %30 : vector<8x4xf32>
    %cst_18 = arith.constant 0.000000e+00 : f32
    %32 = vector.broadcast %cst_18 : f32 to vector<8x4xf32>
    %33 = arith.subf %32, %31 : vector<8x4xf32>
    %c0_19 = arith.constant 0 : index
    %c0_20 = arith.constant 0 : index
    %34 = vector.load %arg6[%c0_19, %c0_20] : memref<8x4xf32, #tpu.memory_space<vmem>>, vector<8x4xf32>
    tpu.vector_store %arg6[%c0_19, %c0_20], %33 {strides = array<i32>} : memref<8x4xf32, #tpu.memory_space<vmem>>, vector<8x4xf32>,
    return
  }
  func.func @transform_0(%arg0: i32) -> (i32, i32) {
    %c0_i32 = arith.constant 0 : i32
    %c0_i32_0 = arith.constant 0 : i32
    return %arg0, %c0_i32 : i32, i32
  }
  func.func @transform_1(%arg0: i32) -> (i32, i32) {
    %c0_i32 = arith.constant 0 : i32
    %c0_i32_0 = arith.constant 0 : i32
    %c0_i32_1 = arith.constant 0 : i32
    return %c0_i32, %c0_i32_0 : i32, i32
  }
  func.func @transform_2(%arg0: i32) -> (i32, i32) {
    %c0_i32 = arith.constant 0 : i32
    %c0_i32_0 = arith.constant 0 : i32
    %c0_i32_1 = arith.constant 0 : i32
    return %c0_i32, %c0_i32_0 : i32, i32
  }
  func.func @transform_3(%arg0: i32) -> (i32, i32) {
    %c0_i32 = arith.constant 0 : i32
    %c0_i32_0 = arith.constant 0 : i32
    return %arg0, %c0_i32 : i32, i32
  }
  func.func @transform_4(%arg0: i32) -> (i32, i32) {
    %c0_i32 = arith.constant 0 : i32
    %c0_i32_0 = arith.constant 0 : i32
    return %arg0, %c0_i32 : i32, i32
  }
  func.func @transform_5(%arg0: i32) -> (i32, i32) {
    %c0_i32 = arith.constant 0 : i32
    %c0_i32_0 = arith.constant 0 : i32
    return %arg0, %c0_i32 : i32, i32
  }
}

</mosaic_0001>

<llo_original>
// kernel: dt1_forward.1
$region0: #{dt1_forward.1}
  #allocation0 [shape = 'u32[]', space=smem, size = 0x4, offset = 0x4, fixed_abs, tag = 'smem constant byte address 0x4 - core index']
  #allocation1 [shape = 'u32[144,128]{1,0:T(1,128)}', space=vmem, size = 0x12000, scoped, tag = 'internal scratch']
  %s0 = inlined_call_operand.vmem [shape: bf16[2,32], index: 0, kind: input, shape index: {}]
  %s1 = inlined_call_operand.vmem [shape: bf16[32,4], index: 1, kind: input, shape index: {}]
  %s2 = inlined_call_operand.vmem [shape: f32[1,4], index: 2, kind: input, shape index: {}]
  %s3 = inlined_call_operand.vmem [shape: f32[2,4], index: 3, kind: input, shape index: {}]
  %s4 = inlined_call_operand.hbm [shape: f32[2,4], index: 4, kind: output, shape index: {0}]
  %s5 = inlined_call_operand.hbm [shape: f32[2,4], index: 5, kind: output, shape index: {1}]
  %6 = xla_tuple %s4, %s5
  %s7 = sld [smem:[#allocation0]]
  $region34: #{dt1_forward.1} parent=0
    _
  %s9 = ssub.s32 1, %s7
  %s10 = scalar_select 0, %s9, %s7
  $region1: #{dt1_forward.1} parent=0
    #allocation2 [shape = 'u8[4096]{0}', space=vmem, size = 0x1000, scoped, tag = 'output window, operand 0, single buffered']
    #allocation3 [shape = 's32[1]{0}', space=sflag, size = 0x4, scoped, tag = 'scoped memory for dt1_forward.1']
    #allocation4 [shape = 'u8[4096]{0}', space=vmem, size = 0x1000, scoped, tag = 'output window, operand 1, single buffered']
    #allocation5 [shape = 's32[1]{0}', space=sflag, size = 0x4, scoped, tag = 'scoped memory for dt1_forward.1']
    %11 = vsyncpa [#allocation3], 0
    %12 = vsyncpa [#allocation5], 0
    // Predicated region
    $region2: #{dt1_forward.1} parent=1 // pred_check
      _
    $region3: #{dt1_forward.1} parent=1 // pred_check_branch
      %14 = sbr.rel (0) target = $region5
    $region4: #{dt1_forward.1} parent=1 // pred_region
      _
    $region5: #{dt1_forward.1} parent=1 // pred_fallthru
      _
    // Predicated region
    $region6: #{dt1_forward.1} parent=1 // pred_check
      _
    $region7: #{dt1_forward.1} parent=1 // pred_check_branch
      %16 = sbr.rel (0) target = $region9
    $region8: #{dt1_forward.1} parent=1 // pred_region
      _
    $region9: #{dt1_forward.1} parent=1 // pred_fallthru
      _
    // Predicated region
    $region10: #{dt1_forward.1} parent=1 // pred_check
      _
    $region11: #{dt1_forward.1} parent=1 // pred_check_branch
      %18 = sbr.rel (0) target = $region13
    $region12: #{dt1_forward.1} parent=1 // pred_region
      _
    $region13: #{dt1_forward.1} parent=1 // pred_fallthru
      _
    // Predicated region
    $region14: #{dt1_forward.1} parent=1 // pred_check
      _
    $region15: #{dt1_forward.1} parent=1 // pred_check_branch
      %20 = sbr.rel (0) target = $region17
    $region16: #{dt1_forward.1} parent=1 // pred_region
      _
    $region17: #{dt1_forward.1} parent=1 // pred_fallthru
      _
    %v22 = vld [vmem:[%s0] sm:$0x1]
    %v23 = vld [vmem:[%s0 + $0x1] sm:$0x1]
    %v24 = vld [vmem:[%s0 + $0x2] sm:$0x1]
    %v25 = vld [vmem:[%s0 + $0x3] sm:$0x1]
    %v26 = vld [vmem:[%s1] sm:$0xf]
    %v27 = vld [vmem:[%s1 + $0x4] sm:$0xf]
    %v28 = vld [vmem:[%s1 + $0x8] sm:$0xf]
    %v29 = vld [vmem:[%s1 + $0xc] sm:$0xf]
    %v30 = vld [vmem:[%s2] sm:$0x1]
    %v32 = vlaneseq
    %v33 = vshrl.u32 %v32, 7
    %v34 = vsub.s32 0, %v33
    %v35 = vrot.slane %v30, %v34
    %v41 = vcombine.low %v22, %v23
    %v42 = vcombine.low %v24, %v25
    %v44 = vunpack.c.l.s4 1966171168
    %v45 = vunpack.c.0.s8 %v44
    %v46 = vlaneseq
    %v47 = vshrl.u32 %v46, 7
    %v48 = vsub.s32 %v45, %v47
    %v49 = vrot.slane %v41, %v48
    %v51 = vunpack.c.l.s4 1966171168
    %v52 = vunpack.c.0.s8 %v51
    %v53 = vlaneseq
    %v54 = vshrl.u32 %v53, 7
    %v55 = vsub.s32 %v52, %v54
    %v56 = vrot.slane %v42, %v55
    %v57 = vcombine.low %v49, %v56
    %v59 = vunpack.c.l.s4 1966171168
    %v60 = vunpack.c.0.s8 %v59
    %v61 = vlaneseq
    %v62 = vshrl.u32 %v61, 7
    %v63 = vsub.s32 %v60, %v62
    %v64 = vrot.slane %v57, %v63
    %v69 = vunpack.c.l.b16 %v26
    %v70 = vunpack.c.l.b16 %v27
    %v71 = vunpack.c.l.b16 %v28
    %v72 = vunpack.c.l.b16 %v29
    %v73 = vpack.c.b16 %v70, %v69
    %v74 = vpack.c.b16 %v72, %v71
    %vm77 = vcmask 261120
    %v79 = vsel %vm77, %v64, 0
    %81 = vmatprep.subr.bf16.mxu0 0
    %82 = vmatpush1.bf16.msra.mxu0 %v73
    %83 = vmatprep.subr.bf16.mxu0 0
    %84 = vmatpush1.bf16.msra.mxu0 %v74
    %85 = vmatprep.subr.bf16.mxu0 0
    %86 = vmatpush1.bf16.msra.mxu0 0
    %87 = vmatprep.subr.bf16.mxu0 0
    %88 = vmatpush1.bf16.msra.mxu0 0
    %89 = vmatprep.subr.bf16.mxu0 0
    %90 = vmatpush1.bf16.msra.mxu0 0
    %91 = vmatprep.subr.bf16.mxu0 0
    %92 = vmatpush1.bf16.msra.mxu0 0
    %93 = vmatprep.subr.bf16.mxu0 0
    %94 = vmatpush1.bf16.msra.mxu0 0
    %95 = vmatprep.subr.bf16.mxu0 0
    %96 = vmatpush1.bf16.msra.mxu0 0
    %97 = vmatprep.subr.bf16.mxu0 0
    %98 = vmatpush1.bf16.msra.mxu0 0
    %99 = vmatprep.subr.bf16.mxu0 0
    %100 = vmatpush1.bf16.msra.mxu0 0
    %101 = vmatprep.subr.bf16.mxu0 0
    %102 = vmatpush1.bf16.msra.mxu0 0
    %103 = vmatprep.subr.bf16.mxu0 0
    %104 = vmatpush1.bf16.msra.mxu0 0
    %105 = vmatprep.subr.bf16.mxu0 0
    %106 = vmatpush1.bf16.msra.mxu0 0
    %107 = vmatprep.subr.bf16.mxu0 0
    %108 = vmatpush1.bf16.msra.mxu0 0
    %109 = vmatprep.subr.bf16.mxu0 0
    %110 = vmatpush1.bf16.msra.mxu0 0
    %111 = vmatprep.subr.bf16.mxu0 0
    %112 = vmatpush1.bf16.msra.mxu0 0
    %113 = vmatprep.mubr.bf16.mxu0 0
    %114 = vmatmul.mubr.bf16.gmra.mrb[0].mxu0 %v79
    %v115 = vpop.f32.mrb[0].mxu0
    %v116 = vadd.f32 %v35, %v115
    %v117 = vpop.f32.mrb[0].mxu0
    %v118 = vpop.f32.mrb[0].mxu0
    %v119 = vpop.f32.mrb[0].mxu0
    %120 = vdwg.mxu0
    %v121 = vsub.f32 0.0, %v116
    %v122 = vmul.f32 %v121, 1.442695
    %v123 = vpow.pop %v122
    %v124 = vadd.f32 %v123, 1.0
    %v125 = vrcp.pop %v124
    %v126 = vmul.f32 1.0, %v125
    %vm127 = vcmask 31744
    %128 = vst.msk [vmem:[#allocation2] sm:$0xff] %vm127, %v126
    %v129 = vld [vmem:[%s3] sm:$0xff]
    %v130 = vadd.f32 %v129, 1.0
    %v131 = vmul.f32 %v130, 0.5
    %v132 = vlog2.pop %v126
    %v133 = vmul.f32 %v132, 0.6931472
    %v134 = vmax.f32 %v133, -100.0
    %v135 = vsub.f32 1.0, %v126
    %v136 = vlog2.pop %v135
    %v137 = vmul.f32 %v136, 0.6931472
    %v138 = vmax.f32 %v137, -100.0
    %v139 = vmul.f32 %v131, %v134
    %v140 = vsub.f32 1.0, %v131
    %v141 = vmul.f32 %v140, %v138
    %v142 = vadd.f32 %v139, %v141
    %v143 = vsub.f32 0.0, %v142
    %144 = vst.msk [vmem:[#allocation4] sm:$0xff] %vm127, %v143
    // Predicated region
    $region18: #{dt1_forward.1} parent=1 // pred_check
      _
    $region19: #{dt1_forward.1} parent=1 // pred_check_branch
      %146 = sbr.rel (0) target = $region21
    $region20: #{dt1_forward.1} parent=1 // pred_region
      %s148 = ssub.s32 128, 32
      %149 = vsyncadd [#allocation3], %s148
      %s150 = sshll.u32 [#allocation2], 4
      %s151 = int_to_ptr.vmem [resolvable:$true] %s150
      %156 = dma.vmem_to_hbm [thread:$0]  %s151, 32, %s4, [#allocation3], 32, 32, 2
    $region21: #{dt1_forward.1} parent=1 // pred_fallthru
      _
    // Predicated region
    $region22: #{dt1_forward.1} parent=1 // pred_check
      _
    $region23: #{dt1_forward.1} parent=1 // pred_check_branch
      %158 = sbr.rel (0) target = $region25
    $region24: #{dt1_forward.1} parent=1 // pred_region
      %s160 = ssub.s32 128, 32
      %161 = vsyncadd [#allocation5], %s160
      %s162 = sshll.u32 [#allocation4], 4
      %s163 = int_to_ptr.vmem [resolvable:$true] %s162
      %168 = dma.vmem_to_hbm [thread:$0]  %s163, 32, %s5, [#allocation5], 32, 32, 2
    $region25: #{dt1_forward.1} parent=1 // pred_fallthru
      _
    // Predicated region
    $region26: #{dt1_forward.1} parent=1 // pred_check
      _
    $region27: #{dt1_forward.1} parent=1 // pred_check_branch
      %170 = sbr.rel (0) target = $region29
    $region28: #{dt1_forward.1} parent=1 // pred_region
      %171 = dma.done [#allocation3], 128
    $region29: #{dt1_forward.1} parent=1 // pred_fallthru
      _
    // Predicated region
    $region30: #{dt1_forward.1} parent=1 // pred_check
      _
    $region31: #{dt1_forward.1} parent=1 // pred_check_branch
      %173 = sbr.rel (0) target = $region33
    $region32: #{dt1_forward.1} parent=1 // pred_region
      %174 = dma.done [#allocation5], 128
    $region33: #{dt1_forward.1} parent=1 // pred_fallthru
      _
    %175 = vsyncpa [#allocation3], 1
    %176 = vsyncpa [#allocation5], 1

</llo_original>
